<compile_context>
chip_gen: v6e
topology: v6e:2x2x1
jax: 0.10.0
libtpu: 0.0.40
codegen_flags: <defaults>
</compile_context>

<pallas_src>
import functools

import jax
import jax.numpy as jnp
from jax.experimental import pallas as pl
from jax.experimental.pallas import tpu as pltpu


_OUT_HW = 16
_HIDDEN = 256
_COL_BLK = 128                      # head output-column block (2 blocks -> 2 TCs on v7x)
_POOL_TILE_BYTES = 4 * 1024 * 1024  # ~4 MiB input tile per pool grid step
_HEAD_BLOCK_K = 16384               # 4 MiB bf16 W1 tile; safe on v7x's 64 MiB VMEM
_VMEM_LIMIT = 48 * 1024 * 1024      # < v7x 64 MiB physical; worst-case usage ~16 MiB


# ----------------------------------------------------------------------------
# Kernel 1: AdaptiveAvgPool2d((16,16)) for H, W multiples of 16.
#
# x viewed as (B*C*16, kh*W): each row holds the kh full input rows feeding one
# output row.  Pooling == one small matmul against Q (kh*W, 16) where
# Q[j*W + w, ow] = 1/(kh*kw) if w // kw == ow else 0.  Each input element is
# read from HBM exactly once (HBM-roofline regime).
# ----------------------------------------------------------------------------
def pool_kernel(x_ref, q_ref, o_ref):
    o_ref[...] = jnp.dot(
        x_ref[...], q_ref[...], preferred_element_type=jnp.float32
    ).astype(o_ref.dtype)


def _make_pool_matrix(kh, kw, W, dtype):
    cols = jnp.arange(kh * W) % W
    ow = cols // kw
    q = jax.nn.one_hot(ow, _OUT_HW, dtype=jnp.float32) / float(kh * kw)
    return q.astype(dtype)


def adaptive_avg_pool_16(x, *, tile_bytes=_POOL_TILE_BYTES, out_dtype=None):
    """x: (B, C, H, W) NCHW (native dtype, e.g. bf16) -> (B, C*256).

    Element ordering matches torch AdaptiveAvgPool2d((16,16)).flatten(1).
    """
    B, C, H, W = x.shape
    if H % _OUT_HW or W % _OUT_HW:
        # TODO(synk): general adaptive-pool windows (H, W not multiples of 16,
        # e.g. real FPN 100x100 maps) are not implemented.
        raise NotImplementedError("H and W must be multiples of 16")
    kh, kw = H // _OUT_HW, W // _OUT_HW
    R = B * C * _OUT_HW
    xv = x.reshape(R, kh * W)               # contiguous view: no copy, no cast
    Q = _make_pool_matrix(kh, kw, W, x.dtype)
    out_dtype = x.dtype if out_dtype is None else out_dtype

    itemsize = x.dtype.itemsize
    align = max(8, 32 // itemsize)          # 8 sublanes (f32) / 16 (bf16)
    row_bytes = kh * W * itemsize
    tr = max(align, (tile_bytes // row_bytes) // align * align)
    if tr >= R:
        tr = R                              # single full-dim block is always legal
    grid = (pl.cdiv(R, tr),)                # partial last block: OOB stores dropped

    pooled = pl.pallas_call(
        pool_kernel,
        out_shape=jax.ShapeDtypeStruct((R, _OUT_HW), out_dtype),
        grid=grid,
        in_specs=[
            pl.BlockSpec((tr, kh * W), lambda i: (i, 0)),
            pl.BlockSpec((kh * W, _OUT_HW), lambda i: (0, 0)),
        ],
        out_specs=pl.BlockSpec((tr, _OUT_HW), lambda i: (i, 0)),
        compiler_params=pltpu.CompilerParams(
            dimension_semantics=("parallel",),
            vmem_limit_bytes=_VMEM_LIMIT,
        ),
    )(xv, Q)
    # TODO(synk): the output block is 16 lanes wide (masked stores); writeback
    # bytes are tiny and hide under the input DMA, so a lane-dense relayout of
    # the pooled tensor is intentionally skipped.
    # (B*C*16, 16) -> (B, C*16*16): same order as flatten(1) of (B,C,16,16).
    return pooled.reshape(B, C * _OUT_HW * _OUT_HW)


# ----------------------------------------------------------------------------
# Kernel 2a: K-streamed Linear(D, 256) -> pre-activation h = p @ W1 + b1.
#   grid = (256 // 128 column blocks ["parallel"], D // tk K blocks ["arbitrary"])
#   f32 VMEM accumulator per column block; optional masking of a partial last
#   K tile (cdiv grid) so awkward D never forces a full-dim tile.
# ----------------------------------------------------------------------------
def uda_matmul_kernel(p_ref, w1_ref, b1_ref, h_ref, acc_ref, *,
                      mask_k, d_total, blk_k):
    k = pl.program_id(1)

    @pl.when(k == 0)
    def _():
        acc_ref[...] = jnp.zeros_like(acc_ref)

    p = p_ref[...]
    w1 = w1_ref[...]
    if mask_k:  # static Python flag: only compiled in when D % blk_k != 0
        k0 = k * blk_k
        lane = k0 + jax.lax.broadcasted_iota(jnp.int32, (1, blk_k), 1)
        sub = k0 + jax.lax.broadcasted_iota(jnp.int32, (blk_k, 1), 0)
        p = jnp.where(lane < d_total, p, jnp.zeros_like(p))
        w1 = jnp.where(sub < d_total, w1, jnp.zeros_like(w1))

    # Weight streaming on the MXU in W1's dtype (bf16), f32 accumulation.
    acc_ref[...] += jnp.dot(p, w1, preferred_element_type=jnp.float32)

    @pl.when(k == pl.num_programs(1) - 1)
    def _():
        h_ref[...] = acc_ref[...] + b1_ref[...]


# ----------------------------------------------------------------------------
# Kernel 2b: tiny epilogue on (B, 256):
#   LayerNorm(256, eps=1e-5) -> ReLU -> Linear(256,1) -> sigmoid -> 0.3 * BCE.
# ----------------------------------------------------------------------------
def uda_epilogue_kernel(h_ref, g_ref, beta_ref, w2_ref, b2_ref, y_ref,
                        loss_ref, probs_ref):
    h = h_ref[...]
    mu = jnp.mean(h, axis=-1, keepdims=True)
    var = jnp.mean((h - mu) * (h - mu), axis=-1, keepdims=True)
    hn = (h - mu) * jax.lax.rsqrt(var + 1e-5)
    hn = hn * g_ref[...] + beta_ref[...]
    hr = jnp.maximum(hn, 0.0)  # ReLU

    logits = jnp.dot(hr, w2_ref[...].astype(jnp.float32),
                     preferred_element_type=jnp.float32) + b2_ref[...]
    probs = jax.nn.sigmoid(logits)

    # BCELoss(probs, y) in stable logits form; keeps PyTorch's -100 clamp.
    #   log(p) = logits - softplus(logits),  log(1-p) = -softplus(logits)
    sp = jnp.maximum(logits, 0.0) + jnp.log(1.0 + jnp.exp(-jnp.abs(logits)))
    log_p = jnp.maximum(logits - sp, -100.0)
    log_1mp = jnp.maximum(-sp, -100.0)
    y = y_ref[...]
    bce = -(y * log_p + (1.0 - y) * log_1mp)

    loss_ref[...] = (0.3 * jnp.mean(bce)) * jnp.ones_like(loss_ref)
    probs_ref[...] = probs.astype(probs_ref.dtype)


def _k_tile(d, target):
    """Pick the head K tile: aligned divisor of d if possible, else cdiv+mask."""
    target = max(128, (target // 128) * 128)
    if d <= target:
        return d, False                       # single full-K block (always legal)
    if d % target == 0:
        return target, False
    t = target
    while t >= 128:                           # largest aligned divisor <= target
        if d % t == 0:
            break
        t -= 128
    if t >= 128 and d % t == 0 and t >= max(1024, target // 4):
        return t, False
    return target, True                       # cdiv grid + masked last K tile


def _w1_blockspec(tk, index_map, n_k):
    # Deeper buffering for the dominant W1 stream; graceful fallback if the
    # pipeline_mode knob is unavailable in this JAX version.
    if n_k >= 3:
        try:
            return pl.BlockSpec((tk, _COL_BLK), index_map,
                                pipeline_mode=pl.Buffered(3))
        except (AttributeError, TypeError):
            pass
    return pl.BlockSpec((tk, _COL_BLK), index_map)


def domain_classifier_loss(p, params, labels, *, block_k=_HEAD_BLOCK_K):
    """Linear(D,256)+LN+ReLU+Linear(256,1)+sigmoid, then 0.3*BCE vs labels.

    W1 should be pre-converted to bf16 ONCE at parameter-setup time (it is
    streamed from HBM every call and dominates the head's cost); it is
    consumed here as-is, with no per-call conversion.
    TODO(synk): int8 (v6e) / fp8 (v7x) W1 streaming would halve bytes again
    but needs accuracy validation for the GRL training signal.
    """
    W1, b1, gamma, beta, W2, b2 = params
    B, D = p.shape
    hid = W1.shape[1]
    assert hid % _COL_BLK == 0

    if p.dtype != W1.dtype:
        p = p.astype(W1.dtype)   # (B, D) is tiny; W1 is never converted here

    tk, mask_k = _k_tile(D, block_k)
    n_k = pl.cdiv(D, tk)
    n_c = hid // _COL_BLK

    kernel = functools.partial(uda_matmul_kernel, mask_k=mask_k, d_total=D,
                               blk_k=tk)
    h = pl.pallas_call(
        kernel,
        out_shape=jax.ShapeDtypeStruct((B, hid), jnp.float32),
        grid=(n_c, n_k),
        in_specs=[
            pl.BlockSpec((B, tk), lambda c, k: (0, k)),          # p tile
            _w1_blockspec(tk, lambda c, k: (k, c), n_k),         # W1 tile
            pl.BlockSpec((1, _COL_BLK), lambda c, k: (0, c)),    # b1 slice
        ],
        out_specs=pl.BlockSpec((B, _COL_BLK), lambda c, k: (0, c)),
        scratch_shapes=[pltpu.VMEM((B, _COL_BLK), jnp.float32)],
        compiler_params=pltpu.CompilerParams(
            dimension_semantics=("parallel", "arbitrary"),
            vmem_limit_bytes=_VMEM_LIMIT,
        ),
    )(p, W1, b1)

    loss, probs = pl.pallas_call(
        uda_epilogue_kernel,
        out_shape=(
            jax.ShapeDtypeStruct((1, 1), jnp.float32),
            jax.ShapeDtypeStruct((B, 1), jnp.float32),
        ),
        grid=(1,),
        in_specs=[
            pl.BlockSpec((B, hid), lambda i: (0, 0)),
            pl.BlockSpec((1, hid), lambda i: (0, 0)),
            pl.BlockSpec((1, hid), lambda i: (0, 0)),
            pl.BlockSpec((hid, 1), lambda i: (0, 0)),
            pl.BlockSpec((1, 1), lambda i: (0, 0)),
            pl.BlockSpec((B, 1), lambda i: (0, 0)),
        ],
        out_specs=(
            pl.BlockSpec((1, 1), lambda i: (0, 0)),
            pl.BlockSpec((B, 1), lambda i: (0, 0)),
        ),
        compiler_params=pltpu.CompilerParams(vmem_limit_bytes=_VMEM_LIMIT),
    )(h, gamma, beta, W2, b2, labels)
    return loss[0, 0], probs


def uda_forward(feats, params, domain="source", alpha=1.0, *,
                pool_tile_bytes=_POOL_TILE_BYTES, head_block_k=_HEAD_BLOCK_K):
    """UDA branch of UDARetinaNet.forward (training path).

    feats: dict {'0','1','2'} of NCHW feature maps (H, W multiples of 16) in
    their native (e.g. bf16) dtype.  Returns (domain_loss, probs).
    TODO(synk): det_loss requires the wrapped torchvision RetinaNet.
    """
    p3 = adaptive_avg_pool_16(feats["0"], tile_bytes=pool_tile_bytes)
    p4 = adaptive_avg_pool_16(feats["1"], tile_bytes=pool_tile_bytes)
    p5 = adaptive_avg_pool_16(feats["2"], tile_bytes=pool_tile_bytes)
    p = jnp.concatenate([p3, p4, p5], axis=1)  # (B, D), tiny
    # GradientReversalLayer forward == identity (alpha only affects backward).
    p_rev = p
    B = p_rev.shape[0]
    domain_val = 0.0 if domain == "source" else 1.0
    labels = jnp.full((B, 1), domain_val, dtype=jnp.float32)
    return domain_classifier_loss(p_rev, params, labels, block_k=head_block_k)


# ----------------------------------------------------------------------------
# Pure-JAX (f32) reference for correctness checking
# ----------------------------------------------------------------------------
def _ref_head(p, params, y):
    W1, b1, gamma, beta, W2, b2 = params
    h = p.astype(jnp.float32) @ W1.astype(jnp.float32) + b1
    mu = h.mean(-1, keepdims=True)
    var = ((h - mu) ** 2).mean(-1, keepdims=True)
    h = (h - mu) / jnp.sqrt(var + 1e-5) * gamma + beta
    h = jnp.maximum(h, 0.0)
    probs = jax.nn.sigmoid(h @ W2 + b2)
    bce = -(y * jnp.log(probs) + (1 - y) * jnp.log(1 - probs))
    return 0.3 * bce.mean(), probs


def ref_forward(feats, params, domain="source"):
    def pool(x):
        B, C, H, W = x.shape
        x = x.astype(jnp.float32).reshape(B, C, 16, H // 16, 16, W // 16)
        return x.mean(axis=(3, 5)).reshape(B, C * 256)

    p = jnp.concatenate([pool(feats["0"]), pool(feats["1"]), pool(feats["2"])],
                        axis=1)
    y = jnp.full((p.shape[0], 1), 0.0 if domain == "source" else 1.0,
                 dtype=jnp.float32)
    return _ref_head(p, params, y)


if __name__ == "__main__":
    key = jax.random.PRNGKey(0)
    kf3, kf4, kf5, kw1, kw2, kp2, kw1b = jax.random.split(key, 7)

    # Small FPN-like feature maps (NCHW, bf16 as a backbone would emit):
    # batch=2, channels=4, spatial 64/32/16.
    B, C = 2, 4
    feats = {
        "0": jax.random.normal(kf3, (B, C, 64, 64), jnp.float32).astype(jnp.bfloat16),
        "1": jax.random.normal(kf4, (B, C, 32, 32), jnp.float32).astype(jnp.bfloat16),
        "2": jax.random.normal(kf5, (B, C, 16, 16), jnp.float32).astype(jnp.bfloat16),
    }

    # Domain classifier params. in_features = 3 * C * 16 * 16 = 3072
    # (the real module uses 49152 * 4 with 256 backbone channels).
    D = 3 * C * _OUT_HW * _OUT_HW
    W1 = jax.random.normal(kw1, (D, _HIDDEN), jnp.float32) * 0.02
    b1 = jnp.zeros((1, _HIDDEN), jnp.float32)
    gamma = jnp.ones((1, _HIDDEN), jnp.float32)
    beta = jnp.zeros((1, _HIDDEN), jnp.float32)
    W2 = jax.random.normal(kw2, (_HIDDEN, 1), jnp.float32) * 0.02
    b2 = jnp.zeros((1, 1), jnp.float32)
    params_f32 = (W1, b1, gamma, beta, W2, b2)
    # One-time (parameter-setup) conversion of the streamed weight to bf16;
    # NOT done inside the per-call forward path.
    params_bf16 = (W1.astype(jnp.bfloat16), b1, gamma, beta, W2, b2)

    # Small tiles to exercise the gridded / K-streamed / partial-block paths at
    # toy scale (defaults are sized for real FPN maps and D = 196608).
    domain_loss, probs = uda_forward(
        feats, params_bf16, domain="source", alpha=1.0,
        pool_tile_bytes=24 * 1024, head_block_k=512)
    domain_loss = jax.block_until_ready(domain_loss)
    probs = jax.block_until_ready(probs)

    ref_loss, ref_probs = ref_forward(feats, params_f32, domain="source")
    # bf16 weight/activation streaming => relaxed tolerances vs f32 reference.
    assert jnp.allclose(domain_loss, ref_loss, rtol=2e-2, atol=2e-3), (domain_loss, ref_loss)
    assert jnp.allclose(probs, ref_probs, rtol=2e-2, atol=5e-3), (probs, ref_probs)

    # Also exercise the masked-last-K-tile head path (D with no good aligned
    # divisor below the tile target).
    D2 = 128 * 31
    p2 = jax.random.normal(kp2, (B, D2), jnp.float32)
    W1b = jax.random.normal(kw1b, (D2, _HIDDEN), jnp.float32) * 0.02
    params2_bf16 = (W1b.astype(jnp.bfloat16), b1, gamma, beta, W2, b2)
    params2_f32 = (W1b, b1, gamma, beta, W2, b2)
    labels2 = jnp.zeros((B, 1), jnp.float32)
    loss2, probs2 = domain_classifier_loss(p2, params2_bf16, labels2, block_k=512)
    loss2 = jax.block_until_ready(loss2)
    probs2 = jax.block_until_ready(probs2)
    ref_loss2, ref_probs2 = _ref_head(p2, params2_f32, labels2)
    assert jnp.allclose(loss2, ref_loss2, rtol=2e-2, atol=2e-3), (loss2, ref_loss2)
    assert jnp.allclose(probs2, ref_probs2, rtol=2e-2, atol=5e-3), (probs2, ref_probs2)

    print("KERNEL_OK")
</pallas_src>

<mosaic_0001>
module attributes {stable_mosaic.version = 11 : i64} {
  func.func @pool_kernel(%arg0: i32, %arg1: memref<48x256xbf16, #tpu.memory_space<vmem>>, %arg2: memref<256x16xbf16, #tpu.memory_space<vmem>>, %arg3: memref<48x16xbf16, #tpu.memory_space<vmem>>) attributes {dimension_semantics = [#tpu.dimension_semantics<parallel>], iteration_bounds = array<i64: 3>, scalar_prefetch = 0 : i64, scratch_operands = 0 : i64, tpu.core_type = #tpu.core_type<tc>, window_params = [{transform_indices = @transform_0, window_bounds = array<i64: 48, 256>}, {pipeline_mode = #tpu.pipeline_mode<synchronous>, transform_indices = @transform_1, window_bounds = array<i64: 256, 16>}, {transform_indices = @transform_2, window_bounds = array<i64: 48, 16>}]} {
    %c0 = arith.constant 0 : index
    %c0_0 = arith.constant 0 : index
    %0 = vector.load %arg1[%c0, %c0_0] : memref<48x256xbf16, #tpu.memory_space<vmem>>, vector<48x256xbf16>
    %c0_1 = arith.constant 0 : index
    %c0_2 = arith.constant 0 : index
    %1 = vector.load %arg2[%c0_1, %c0_2] : memref<256x16xbf16, #tpu.memory_space<vmem>>, vector<256x16xbf16>
    %cst = arith.constant dense<0.000000e+00> : vector<48x16xf32>
    %2 = tpu.matmul %0, %1, %cst {dimension_numbers = #tpu.dot_dimension_numbers<[1], [0], [0], [1], [0, 0, 1, 1], [], []>} : vector<48x256xbf16>, vector<256x16xbf16>, vector<48x16xf32> -> vector<48x16xf32>
    %3 = arith.truncf %2 : vector<48x16xf32> to vector<48x16xbf16>
    %c0_3 = arith.constant 0 : index
    %c0_4 = arith.constant 0 : index
    %4 = vector.load %arg3[%c0_3, %c0_4] : memref<48x16xbf16, #tpu.memory_space<vmem>>, vector<48x16xbf16>
    tpu.vector_store %arg3[%c0_3, %c0_4], %3 {strides = array<i32>} : memref<48x16xbf16, #tpu.memory_space<vmem>>, vector<48x16xbf16>,
    return
  }
  func.func @transform_0(%arg0: i32) -> (i32, i32) {
    %c0_i32 = arith.constant 0 : i32
    %c0_i32_0 = arith.constant 0 : i32
    return %arg0, %c0_i32 : i32, i32
  }
  func.func @transform_1(%arg0: i32) -> (i32, i32) {
    %c0_i32 = arith.constant 0 : i32
    %c0_i32_0 = arith.constant 0 : i32
    %c0_i32_1 = arith.constant 0 : i32
    return %c0_i32, %c0_i32_0 : i32, i32
  }
  func.func @transform_2(%arg0: i32) -> (i32, i32) {
    %c0_i32 = arith.constant 0 : i32
    %c0_i32_0 = arith.constant 0 : i32
    return %arg0, %c0_i32 : i32, i32
  }
}

</mosaic_0001>

<llo_original>
// kernel: tpu_custom_call.1
$region0: #{tpu_custom_call.1}
  #allocation0 [shape = 'u32[]', space=smem, size = 0x4, offset = 0x4, fixed_abs, tag = 'smem constant byte address 0x4 - core index']
  #allocation1 [shape = 'u32[144,128]{1,0:T(1,128)}', space=vmem, size = 0x12000, scoped, tag = 'internal scratch']
  %s0 = inlined_call_operand.vmem [shape: bf16[128,256], index: 0, kind: input, shape index: {}]
  %s1 = inlined_call_operand.vmem [shape: bf16[256,16], index: 1, kind: input, shape index: {}]
  %s2 = inlined_call_operand.vmem [shape: bf16[128,16], index: 2, kind: output, shape index: {}]
  %s3 = sld [smem:[#allocation0]]
  $region85: #{tpu_custom_call.1} parent=0
    _
  %s5 = ssub.s32 1, %s3
  %s6 = scalar_select 0, %s5, %s3
  $region1: #{tpu_custom_call.1} parent=0
    #allocation2 [shape = 'u8[24576]{0}', space=vmem, size = 0x6000, scoped, tag = 'output window, operand 0']
    loop: start=0, step=1, limit=5
    $region2: #{tpu_custom_call.1} parent=1 // loop_pre_header
      _
    $region3: #{tpu_custom_call.1} parent=1 // loop_header
      %s8 = sphi 0, %s12
      %p9 = scmp.ge.s32.totalorder %s8, 5
      %s18 = sphi 0, %s20
      %s21 = sphi 0, %s18
      %s22 = sphi 0, %s21
      %s38 = sphi 0, %s22
      %s42 = sphi 0, %s42
      %s44 = sphi 0, %s42
      %s45 = sphi 0, %s44
      %s59 = sphi 0, %s45
      %s65 = sphi 0, %s67
      %s68 = sphi 0, %s65
      %s69 = sphi 0, %s68
      %s85 = sphi 0, %s69
    $region4: #{tpu_custom_call.1} parent=1 // loop_header_branch
      %11 = sbr.rel (%p9) target = $region8
    $region5: #{tpu_custom_call.1} parent=1 // loop_body
      %s13 = ssub.s32 %s8, 1
      %s14 = ssub.s32 %s8, 2
      %s15 = sadd.s32 %s8, 1
      %s16 = ssub.s32 %s8, %s15
      %p17 = scmp.eq.s32.totalorder %s16, 0
      %s19 = sadd.s32 %s18, 1
      %s20 = scalar_select %p17, %s18, %s19
      %p23 = pneg %p17
      %p24 = scmp.eq.s32.totalorder %s8, 2
      %p25 = por %p23, %p24
      %p26 = scmp.ne.s32.totalorder %s18, %s21
      %p27 = scmp.eq.s32.totalorder %s8, 0
      %p28 = por %p26, %p27
      %p29 = scmp.ne.s32.totalorder %s18, %s21
      %p30 = scmp.eq.s32.totalorder %s13, 2
      %p31 = por %p29, %p30
      %p32 = scmp.ne.s32.totalorder %s21, %s22
      %p33 = scmp.eq.s32.totalorder %s13, 0
      %p34 = por %p32, %p33
      %p35 = scmp.ne.s32.totalorder %s21, %s22
      %p36 = scmp.eq.s32.totalorder %s14, 2
      %p37 = por %p35, %p36
      %p39 = scmp.ne.s32.totalorder %s22, %s38
      %p40 = scmp.eq.s32.totalorder %s14, 0
      %p41 = por %p39, %p40
      %s43 = sadd.s32 %s42, 1
      %p46 = scmp.eq.s32.totalorder %s8, 2
      %p47 = scmp.ne.s32.totalorder %s42, %s44
      %p48 = scmp.eq.s32.totalorder %s8, 0
      %p49 = por %p47, %p48
      %p50 = scmp.ne.s32.totalorder %s42, %s44
      %p51 = scmp.eq.s32.totalorder %s13, 2
      %p52 = por %p50, %p51
      %p53 = scmp.ne.s32.totalorder %s44, %s45
      %p54 = scmp.eq.s32.totalorder %s13, 0
      %p55 = por %p53, %p54
      %p56 = scmp.ne.s32.totalorder %s44, %s45
      %p57 = scmp.eq.s32.totalorder %s14, 2
      %p58 = por %p56, %p57
      %p60 = scmp.ne.s32.totalorder %s45, %s59
      %p61 = scmp.eq.s32.totalorder %s14, 0
      %p62 = por %p60, %p61
      %s63 = ssub.s32 %s8, %s15
      %p64 = scmp.eq.s32.totalorder %s63, 0
      %s66 = sadd.s32 %s65, 1
      %s67 = scalar_select %p64, %s65, %s66
      %p70 = pneg %p64
      %p71 = scmp.eq.s32.totalorder %s8, 2
      %p72 = por %p70, %p71
      %p73 = scmp.ne.s32.totalorder %s65, %s68
      %p74 = scmp.eq.s32.totalorder %s8, 0
      %p75 = por %p73, %p74
      %p76 = scmp.ne.s32.totalorder %s65, %s68
      %p77 = scmp.eq.s32.totalorder %s13, 2
      %p78 = por %p76, %p77
      %p79 = scmp.ne.s32.totalorder %s68, %s69
      %p80 = scmp.eq.s32.totalorder %s13, 0
      %p81 = por %p79, %p80
      %p82 = scmp.ne.s32.totalorder %s68, %s69
      %p83 = scmp.eq.s32.totalorder %s14, 2
      %p84 = por %p82, %p83
      %p86 = scmp.ne.s32.totalorder %s69, %s85
      %p87 = scmp.eq.s32.totalorder %s14, 0
      %p88 = por %p86, %p87
      %p89 = scmp.le.s32.totalorder 1, %s8
      %p90 = scmp.lt.s32.totalorder %s8, 4
      %p91 = pnand %p89, %p90
      %p92 = pneg %p91
      // Predicated region
      $region9: #{tpu_custom_call.1} parent=5 // pred_check
        _
      $region10: #{tpu_custom_call.1} parent=5 // pred_check_branch
        %94 = sbr.rel (%p91) target = $region12
      $region11: #{tpu_custom_call.1} parent=5 // pred_region
        %s95 = ssub.s32 %s8, 1
        // Predicated region
        $region13: #{tpu_custom_call.1} parent=11 // pred_check
          %p96 = pneg %p55
        $region14: #{tpu_custom_call.1} parent=11 // pred_check_branch
          %98 = sbr.rel (%p96) target = $region16
        $region15: #{tpu_custom_call.1} parent=11 // pred_region
          _
        $region16: #{tpu_custom_call.1} parent=11 // pred_fallthru
          _
      $region12: #{tpu_custom_call.1} parent=5 // pred_fallthru
        _
      %p99 = scmp.lt.s32.totalorder %s8, 3
      // Predicated region
      $region17: #{tpu_custom_call.1} parent=5 // pred_check
        %p100 = pneg %p99
      $region18: #{tpu_custom_call.1} parent=5 // pred_check_branch
        %102 = sbr.rel (%p100) target = $region20
      $region19: #{tpu_custom_call.1} parent=5 // pred_region
        // Predicated region
        $region21: #{tpu_custom_call.1} parent=19 // pred_check
          %p103 = pneg %p28
        $region22: #{tpu_custom_call.1} parent=19 // pred_check_branch
          %105 = sbr.rel (%p103) target = $region24
        $region23: #{tpu_custom_call.1} parent=19 // pred_region
          %s106 = smul.u32 6, %s8
          %s107 = ssub.s32 16, %s106
          %p108 = scmp.lt.s32.totalorder %s107, 6
          %s109 = scalar_select %p108, %s107, 6
          %s110 = smul.u32 64, %s109
          %s111 = smul.u32 %s110, 2
          %p112 = scmp.lt.s32.totalorder %s106, 15
          %s113 = scalar_select %p112, %s106, 15
          %s114 = smul.addr %s113, 2
          %s115 = smul.addr %s114, 4
          %s116 = scalar_lea.vmem %s0, %s115
          %s117 = smul.u32 6, %s8
          %s118 = ssub.s32 16, %s117
          %p119 = scmp.lt.s32.totalorder %s118, 6
          %s120 = scalar_select %p119, %s118, 6
          %s121 = smul.u32 64, %s120
          %s122 = smul.u32 %s121, 2
        $region24: #{tpu_custom_call.1} parent=19 // pred_fallthru
          _
      $region20: #{tpu_custom_call.1} parent=5 // pred_fallthru
        _
      %p123 = scmp.le.s32.totalorder 1, %s8
      %p124 = scmp.lt.s32.totalorder %s8, 4
      %p125 = pnand %p123, %p124
      %p126 = pneg %p125
      // Predicated region
      $region25: #{tpu_custom_call.1} parent=5 // pred_check
        _
      $region26: #{tpu_custom_call.1} parent=5 // pred_check_branch
        %128 = sbr.rel (%p125) target = $region28
      $region27: #{tpu_custom_call.1} parent=5 // pred_region
        %s129 = ssub.s32 %s8, 1
        %s130 = smul.u32 6, %s13
        %s131 = ssub.s32 16, %s130
        %p132 = scmp.lt.s32.totalorder %s131, 6
        %s133 = scalar_select %p132, %s131, 6
        %s134 = smul.u32 64, %s133
        %s135 = smul.u32 %s134, 2
        %p136 = scmp.lt.s32.totalorder %s130, 15
        %s137 = scalar_select %p136, %s130, 15
        %s138 = smul.addr %s137, 2
        %s139 = smul.addr %s138, 4
        %s140 = scalar_lea.vmem %s0, %s139
        %p141 = pneg %p34
        %p142 = pneg %p31
        %p143 = pneg %p55
        %p144 = pneg %p52
        %p145 = pneg %p81
        %p146 = pneg %p78
        %s147 = sand.u32 %s68, 1
        %s148 = sand.u32 %s68, 1
        %s149 = smul.addr %s148, 24
        %s150 = scalar_lea.vmem [#allocation2], %s149
        %s151 = smul.u32 6, %s13
        %s152 = ssub.s32 16, %s151
        %p153 = scmp.lt.s32.totalorder %s152, 6
        %s154 = scalar_select %p153, %s152, 6
        %s155 = smul.u32 64, %s154
        %s156 = smul.u32 %s155, 2
        %p157 = scmp.lt.s32.totalorder %s151, 15
        %s158 = scalar_select %p157, %s151, 15
        %s159 = smul.addr %s158, 2
        %s160 = smul.addr %s159, 4
        %s161 = scalar_lea.vmem %s0, %s160
        %s162 = smul.u32 6, %s13
        %s163 = ssub.s32 16, %s162
        %p164 = scmp.lt.s32.totalorder %s163, 6
        %s165 = scalar_select %p164, %s163, 6
        %s166 = smul.u32 64, %s165
        %s167 = smul.u32 %s166, 2
        %s168 = smul.u32 6, %s13
        %s169 = ssub.s32 16, %s168
        %p170 = scmp.lt.s32.totalorder %s169, 6
        %s171 = scalar_select %p170, %s169, 6
        %s172 = smul.u32 64, %s171
        %v174 = vld [vmem:[%s161] sm:$0xff]
        %v175 = vld [vmem:[%s161 + $0x8] sm:$0xff]
        %v176 = vld [vmem:[%s161 + $0x10] sm:$0xff]
        %v177 = vld [vmem:[%s161 + $0x18] sm:$0xff]
        %v178 = vld [vmem:[%s161 + $0x20] sm:$0xff]
        %v179 = vld [vmem:[%s161 + $0x28] sm:$0xff]
        %v180 = vld [vmem:[%s1] sm:$0xf]
        %v181 = vld [vmem:[%s1 + $0x4] sm:$0xf]
        %v182 = vld [vmem:[%s1 + $0x8] sm:$0xf]
        %v183 = vld [vmem:[%s1 + $0xc] sm:$0xf]
        %v184 = vld [vmem:[%s1 + $0x10] sm:$0xf]
        %v185 = vld [vmem:[%s1 + $0x14] sm:$0xf]
        %v186 = vld [vmem:[%s1 + $0x18] sm:$0xf]
        %v187 = vld [vmem:[%s1 + $0x1c] sm:$0xf]
        %v188 = vld [vmem:[%s1 + $0x20] sm:$0xf]
        %v189 = vld [vmem:[%s1 + $0x24] sm:$0xf]
        %v190 = vld [vmem:[%s1 + $0x28] sm:$0xf]
        %v191 = vld [vmem:[%s1 + $0x2c] sm:$0xf]
        %v192 = vld [vmem:[%s1 + $0x30] sm:$0xf]
        %v193 = vld [vmem:[%s1 + $0x34] sm:$0xf]
        %v194 = vld [vmem:[%s1 + $0x38] sm:$0xf]
        %v195 = vld [vmem:[%s1 + $0x3c] sm:$0xf]
        %v196 = vld [vmem:[%s1 + $0x40] sm:$0xf]
        %v197 = vld [vmem:[%s1 + $0x44] sm:$0xf]
        %v198 = vld [vmem:[%s1 + $0x48] sm:$0xf]
        %v199 = vld [vmem:[%s1 + $0x4c] sm:$0xf]
        %v200 = vld [vmem:[%s1 + $0x50] sm:$0xf]
        %v201 = vld [vmem:[%s1 + $0x54] sm:$0xf]
        %v202 = vld [vmem:[%s1 + $0x58] sm:$0xf]
        %v203 = vld [vmem:[%s1 + $0x5c] sm:$0xf]
        %v204 = vld [vmem:[%s1 + $0x60] sm:$0xf]
        %v205 = vld [vmem:[%s1 + $0x64] sm:$0xf]
        %v206 = vld [vmem:[%s1 + $0x68] sm:$0xf]
        %v207 = vld [vmem:[%s1 + $0x6c] sm:$0xf]
        %v208 = vld [vmem:[%s1 + $0x70] sm:$0xf]
        %v209 = vld [vmem:[%s1 + $0x74] sm:$0xf]
        %v210 = vld [vmem:[%s1 + $0x78] sm:$0xf]
        %v211 = vld [vmem:[%s1 + $0x7c] sm:$0xf]
        %v218 = vunpack.c.l.b16 %v174
        %v219 = vunpack.c.h.b16 %v174
        %v220 = vunpack.c.l.b16 %v175
        %v221 = vunpack.c.h.b16 %v175
        %v222 = vunpack.c.l.b16 %v176
        %v223 = vunpack.c.h.b16 %v176
        %v224 = vunpack.c.l.b16 %v177
        %v225 = vunpack.c.h.b16 %v177
        %v226 = vunpack.c.l.b16 %v178
        %v227 = vunpack.c.h.b16 %v178
        %v228 = vunpack.c.l.b16 %v179
        %v229 = vunpack.c.h.b16 %v179
        %v230 = vpack.c.b16 %v220, %v218
        %v231 = vpack.c.b16 %v221, %v219
        %v232 = vpack.c.b16 %v224, %v222
        %v233 = vpack.c.b16 %v225, %v223
        %v234 = vpack.c.b16 %v228, %v226
        %v235 = vpack.c.b16 %v229, %v227
        %v274 = vunpack.c.l.b16 %v180
        %v275 = vunpack.c.l.b16 %v181
        %v276 = vunpack.c.l.b16 %v182
        %v277 = vunpack.c.l.b16 %v183
        %v278 = vunpack.c.l.b16 %v184
        %v279 = vunpack.c.l.b16 %v185
        %v280 = vunpack.c.l.b16 %v186
        %v281 = vunpack.c.l.b16 %v187
        %v282 = vunpack.c.l.b16 %v188
        %v283 = vunpack.c.l.b16 %v189
        %v284 = vunpack.c.l.b16 %v190
        %v285 = vunpack.c.l.b16 %v191
        %v286 = vunpack.c.l.b16 %v192
        %v287 = vunpack.c.l.b16 %v193
        %v288 = vunpack.c.l.b16 %v194
        %v289 = vunpack.c.l.b16 %v195
        %v290 = vunpack.c.l.b16 %v196
        %v291 = vunpack.c.l.b16 %v197
        %v292 = vunpack.c.l.b16 %v198
        %v293 = vunpack.c.l.b16 %v199
        %v294 = vunpack.c.l.b16 %v200
        %v295 = vunpack.c.l.b16 %v201
        %v296 = vunpack.c.l.b16 %v202
        %v297 = vunpack.c.l.b16 %v203
        %v298 = vunpack.c.l.b16 %v204
        %v299 = vunpack.c.l.b16 %v205
        %v300 = vunpack.c.l.b16 %v206
        %v301 = vunpack.c.l.b16 %v207
        %v302 = vunpack.c.l.b16 %v208
        %v303 = vunpack.c.l.b16 %v209
        %v304 = vunpack.c.l.b16 %v210
        %v305 = vunpack.c.l.b16 %v211
        %v306 = vpack.c.b16 %v275, %v274
        %v307 = vpack.c.b16 %v277, %v276
        %v308 = vpack.c.b16 %v279, %v278
        %v309 = vpack.c.b16 %v281, %v280
        %v310 = vpack.c.b16 %v283, %v282
        %v311 = vpack.c.b16 %v285, %v284
        %v312 = vpack.c.b16 %v287, %v286
        %v313 = vpack.c.b16 %v289, %v288
        %v314 = vpack.c.b16 %v291, %v290
        %v315 = vpack.c.b16 %v293, %v292
        %v316 = vpack.c.b16 %v295, %v294
        %v317 = vpack.c.b16 %v297, %v296
        %v318 = vpack.c.b16 %v299, %v298
        %v319 = vpack.c.b16 %v301, %v300
        %v320 = vpack.c.b16 %v303, %v302
        %v321 = vpack.c.b16 %v305, %v304
        %338 = vmatprep.subr.bf16.mxu0 0
        %339 = vmatpush1.bf16.msra.mxu0 %v313
        %340 = vmatprep.subr.bf16.mxu0 0
        %341 = vmatpush1.bf16.msra.mxu0 %v312
        %342 = vmatprep.subr.bf16.mxu0 0
        %343 = vmatpush1.bf16.msra.mxu0 %v311
        %344 = vmatprep.subr.bf16.mxu0 0
        %345 = vmatpush1.bf16.msra.mxu0 %v310
        %346 = vmatprep.subr.bf16.mxu0 0
        %347 = vmatpush1.bf16.msra.mxu0 %v309
        %348 = vmatprep.subr.bf16.mxu0 0
        %349 = vmatpush1.bf16.msra.mxu0 %v308
        %350 = vmatprep.subr.bf16.mxu0 0
        %351 = vmatpush1.bf16.msra.mxu0 %v307
        %352 = vmatprep.subr.bf16.mxu0 0
        %353 = vmatpush1.bf16.msra.mxu0 %v306
        %354 = vmatprep.subr.bf16.mxu0 0
        %355 = vmatpush2.bf16.msra.mxu0 %v321
        %356 = vmatprep.subr.bf16.mxu0 0
        %357 = vmatpush2.bf16.msra.mxu0 %v320
        %358 = vmatprep.subr.bf16.mxu0 0
        %359 = vmatpush2.bf16.msra.mxu0 %v319
        %360 = vmatprep.subr.bf16.mxu0 0
        %361 = vmatpush2.bf16.msra.mxu0 %v318
        %362 = vmatprep.subr.bf16.mxu0 0
        %363 = vmatpush2.bf16.msra.mxu0 %v317
        %364 = vmatprep.subr.bf16.mxu0 0
        %365 = vmatpush2.bf16.msra.mxu0 %v316
        %366 = vmatprep.subr.bf16.mxu0 0
        %367 = vmatpush2.bf16.msra.mxu0 %v315
        %368 = vmatprep.subr.bf16.mxu0 0
        %369 = vmatpush2.bf16.msra.mxu0 %v314
        %370 = vmatprep.mubr.bf16.mxu0 %v231
        %371 = vmatmul.mubr.bf16.gmra.mxu0 %v230
        %v372 = vpop.f32.mrf.mxu0
        %v373 = vadd.f32 0.0, %v372
        %v374 = vpop.f32.mrf.mxu0
        %v375 = vpop.f32.mrf.mxu0
        %v376 = vadd.f32 0.0, %v375
        %v377 = vpop.f32.mrf.mxu0
        %378 = vmatprep.mubr.bf16.mxu0 %v233
        %379 = vmatmul.mubr.bf16.gmra.mxu0 %v232
        %v380 = vpop.f32.mrf.mxu0
        %v381 = vadd.f32 0.0, %v380
        %v382 = vpop.f32.mrf.mxu0
        %v383 = vpop.f32.mrf.mxu0
        %v384 = vadd.f32 0.0, %v383
        %v385 = vpop.f32.mrf.mxu0
        %386 = vmatprep.mubr.bf16.mxu0 %v235
        %387 = vmatmul.mubr.bf16.gmra.mxu0 %v234
        %v388 = vpop.f32.mrf.mxu0
        %v389 = vadd.f32 0.0, %v388
        %v390 = vpop.f32.mrf.mxu0
        %v391 = vpop.f32.mrf.mxu0
        %v392 = vadd.f32 0.0, %v391
        %v393 = vpop.f32.mrf.mxu0
        %394 = vdwg.mxu0
        %v395 = vpack.c.bf16 %v376, %v373
        %v396 = vpack.c.bf16 %v384, %v381
        %v397 = vpack.c.bf16 %v392, %v389
        %v401 = vunpack.c.l.b16 %v395
        %v402 = vunpack.c.h.b16 %v395
        %v403 = vunpack.c.l.b16 %v396
        %v404 = vunpack.c.h.b16 %v396
        %v405 = vunpack.c.l.b16 %v397
        %v406 = vunpack.c.h.b16 %v397
        %v407 = vpack.c.b16 %v401, %v401
        %v408 = vpack.c.b16 %v402, %v402
        %v409 = vpack.c.b16 %v403, %v403
        %v410 = vpack.c.b16 %v404, %v404
        %v411 = vpack.c.b16 %v405, %v405
        %v412 = vpack.c.b16 %v406, %v406
        %vm419 = vcmask 125952
        %420 = vst.msk [vmem:[%s150] sm:$0xf] %vm419, %v407
        %421 = vst.msk [vmem:[%s150 + $0x4] sm:$0xf] %vm419, %v408
        %422 = vst.msk [vmem:[%s150 + $0x8] sm:$0xf] %vm419, %v409
        %423 = vst.msk [vmem:[%s150 + $0xc] sm:$0xf] %vm419, %v410
        %424 = vst.msk [vmem:[%s150 + $0x10] sm:$0xf] %vm419, %v411
        %425 = vst.msk [vmem:[%s150 + $0x14] sm:$0xf] %vm419, %v412
        %s426 = sand.u32 %s68, 1
        %s427 = sand.u32 %s68, 1
        %s428 = smul.addr %s427, 24
        %s429 = scalar_lea.vmem [#allocation2], %s428
        // Predicated region
        $region29: #{tpu_custom_call.1} parent=27 // pred_check
          %p430 = pneg %p78
        $region30: #{tpu_custom_call.1} parent=27 // pred_check_branch
          %432 = sbr.rel (%p430) target = $region32
        $region31: #{tpu_custom_call.1} parent=27 // pred_region
          %s433 = smul.u32 6, %s13
          %s434 = ssub.s32 16, %s433
          %p435 = scmp.lt.s32.totalorder %s434, 6
          %s436 = scalar_select %p435, %s434, 6
          %s437 = smul.u32 64, %s436
          %p438 = scmp.ne.s32.totalorder 0, %s437
          %s439 = smul.addr %s433, 4
          %s440 = scalar_lea.vmem %s2, %s439
          // Predicated region
          $region33: #{tpu_custom_call.1} parent=31 // pred_check
            %p441 = pneg %p438
          $region34: #{tpu_custom_call.1} parent=31 // pred_check_branch
            %443 = sbr.rel (%p441) target = $region36
          $region35: #{tpu_custom_call.1} parent=31 // pred_region
            // Predicated region
            $region37: #{tpu_custom_call.1} parent=35 // pred_check
              _
            $region38: #{tpu_custom_call.1} parent=35 // pred_check_branch
              %445 = sbr.rel target = $region40
            $region39: #{tpu_custom_call.1} parent=35 // pred_region
              // Predicated region
              $region59: #{tpu_custom_call.1} parent=39 // pred_check
                _
              $region60: #{tpu_custom_call.1} parent=39 // pred_check_branch
                %506 = sbr.rel (0) target = $region62
              $region61: #{tpu_custom_call.1} parent=39 // pred_region
                %s508 = ssub.s32 16, 1
                %s509 = sdiv.u32.pop %s436, 6
                %s510 = srem.u32.pop %s436, 6
                // While loop
                $region63: #{tpu_custom_call.1} parent=61 // loop_pre_header
                  _
                $region64: #{tpu_custom_call.1} parent=61 // loop_header
                  %s512 = sphi 0, %s514
                  %p513 = scmp.ge.s32.totalorder %s512, %s509
                  %s517 = sphi 0, %s534
                  %s518 = sphi %s429, %s537
                  %s519 = sphi %s440, %s538
                $region65: #{tpu_custom_call.1} parent=61 // loop_header_branch
                  %516 = sbr.rel (%p513) target = $region69
                $region66: #{tpu_custom_call.1} parent=61 // loop_body
                  %v520 = vld [vmem:[%s518] sm:%s508]
                  %521 = vst [vmem:[%s519] sm:%s508] %v520
                  %v522 = vld [vmem:[%s518 + $0x4] sm:%s508]
                  %523 = vst [vmem:[%s519 + $0x4] sm:%s508] %v522
                  %v524 = vld [vmem:[%s518 + $0x8] sm:%s508]
                  %525 = vst [vmem:[%s519 + $0x8] sm:%s508] %v524
                  %v526 = vld [vmem:[%s518 + $0xc] sm:%s508]
                  %527 = vst [vmem:[%s519 + $0xc] sm:%s508] %v526
                  %v528 = vld [vmem:[%s518 + $0x10] sm:%s508]
                  %529 = vst [vmem:[%s519 + $0x10] sm:%s508] %v528
                  %v530 = vld [vmem:[%s518 + $0x14] sm:%s508]
                  %531 = vst [vmem:[%s519 + $0x14] sm:%s508] %v530
                  %s532 = sadd.s32 1, %s517
                  %p533 = scmp.ge.s32.totalorder %s532, %s509
                  %s534 = scalar_select %p533, 0, %s532
                  %s535 = smul.u32 %s534, 24
                  %s536 = smul.u32 %s534, 24
                  %s537 = scalar_lea.vmem %s429, %s535 [#allocation2]
                  %s538 = scalar_lea.vmem %s440, %s536
                $region67: #{tpu_custom_call.1} parent=61 // loop_footer
                  %s514 = sadd.s32 %s512, 1
                $region68: #{tpu_custom_call.1} parent=61 // loop_footer_branch
                  %511 = sbr.rel target = $region64
                $region69: #{tpu_custom_call.1} parent=61 // loop_exit
                  _
                %s539 = sdiv.u32.pop %s436, 6
                %s540 = srem.u32.pop %s436, 6
                %s541 = smul.u32 %s539, 6
                %s542 = smul.u32 4, %s541
                %s543 = scalar_lea.vmem %s429, %s542 [#allocation2]
                %s544 = smul.u32 4, %s541
                %s545 = scalar_lea.vmem %s440, %s544
                // While loop
                $region70: #{tpu_custom_call.1} parent=61 // loop_pre_header
                  _
                $region71: #{tpu_custom_call.1} parent=61 // loop_header
                  %s547 = sphi 0, %s549
                  %p548 = scmp.ge.s32.totalorder %s547, %s540
                  %s552 = sphi 0, %s559
                  %s553 = sphi %s543, %s562
                  %s554 = sphi %s545, %s563
                $region72: #{tpu_custom_call.1} parent=61 // loop_header_branch
                  %551 = sbr.rel (%p548) target = $region76
                $region73: #{tpu_custom_call.1} parent=61 // loop_body
                  %v555 = vld [vmem:[%s553] sm:%s508]
                  %556 = vst [vmem:[%s554] sm:%s508] %v555
                  %s557 = sadd.s32 1, %s552
                  %p558 = scmp.ge.s32.totalorder %s557, %s540
                  %s559 = scalar_select %p558, 0, %s557
                  %s560 = smul.u32 %s559, 4
                  %s561 = smul.u32 %s559, 4
                  %s562 = scalar_lea.vmem %s543, %s560 [#allocation2]
                  %s563 = scalar_lea.vmem %s545, %s561
                $region74: #{tpu_custom_call.1} parent=61 // loop_footer
                  %s549 = sadd.s32 %s547, 1
                $region75: #{tpu_custom_call.1} parent=61 // loop_footer_branch
                  %546 = sbr.rel target = $region71
                $region76: #{tpu_custom_call.1} parent=61 // loop_exit
                  _
              $region62: #{tpu_custom_call.1} parent=39 // pred_fallthru
                _
            $region40: #{tpu_custom_call.1} parent=35 // pred_fallthru
              _
            // Predicated region
            $region41: #{tpu_custom_call.1} parent=35 // pred_check
              _
            $region42: #{tpu_custom_call.1} parent=35 // pred_check_branch
              %447 = sbr.rel (0) target = $region44
            $region43: #{tpu_custom_call.1} parent=35 // pred_region
              %s449 = ssub.s32 16, 1
              %s450 = sdiv.u32.pop %s436, 6
              %s451 = srem.u32.pop %s436, 6
              // While loop
              $region45: #{tpu_custom_call.1} parent=43 // loop_pre_header
                _
              $region46: #{tpu_custom_call.1} parent=43 // loop_header
                %s453 = sphi 0, %s455
                %p454 = scmp.ge.s32.totalorder %s453, %s450
                %s458 = sphi 0, %s475
                %s459 = sphi %s429, %s478
                %s460 = sphi %s440, %s479
              $region47: #{tpu_custom_call.1} parent=43 // loop_header_branch
                %457 = sbr.rel (%p454) target = $region51
              $region48: #{tpu_custom_call.1} parent=43 // loop_body
                %v461 = vld [vmem:[%s459] sm:%s449]
                %462 = vst [vmem:[%s460] sm:%s449] %v461
                %v463 = vld [vmem:[%s459 + $0x4] sm:%s449]
                %464 = vst [vmem:[%s460 + $0x4] sm:%s449] %v463
                %v465 = vld [vmem:[%s459 + $0x8] sm:%s449]
                %466 = vst [vmem:[%s460 + $0x8] sm:%s449] %v465
                %v467 = vld [vmem:[%s459 + $0xc] sm:%s449]
                %468 = vst [vmem:[%s460 + $0xc] sm:%s449] %v467
                %v469 = vld [vmem:[%s459 + $0x10] sm:%s449]
                %470 = vst [vmem:[%s460 + $0x10] sm:%s449] %v469
                %v471 = vld [vmem:[%s459 + $0x14] sm:%s449]
                %472 = vst [vmem:[%s460 + $0x14] sm:%s449] %v471
                %s473 = sadd.s32 1, %s458
                %p474 = scmp.ge.s32.totalorder %s473, %s450
                %s475 = scalar_select %p474, 0, %s473
                %s476 = smul.u32 %s475, 24
                %s477 = smul.u32 %s475, 24
                %s478 = scalar_lea.vmem %s429, %s476 [#allocation2]
                %s479 = scalar_lea.vmem %s440, %s477
              $region49: #{tpu_custom_call.1} parent=43 // loop_footer
                %s455 = sadd.s32 %s453, 1
              $region50: #{tpu_custom_call.1} parent=43 // loop_footer_branch
                %452 = sbr.rel target = $region46
              $region51: #{tpu_custom_call.1} parent=43 // loop_exit
                _
              %s480 = sdiv.u32.pop %s436, 6
              %s481 = srem.u32.pop %s436, 6
              %s482 = smul.u32 %s480, 6
              %s483 = smul.u32 4, %s482
              %s484 = scalar_lea.vmem %s429, %s483 [#allocation2]
              %s485 = smul.u32 4, %s482
              %s486 = scalar_lea.vmem %s440, %s485
              // While loop
              $region52: #{tpu_custom_call.1} parent=43 // loop_pre_header
                _
              $region53: #{tpu_custom_call.1} parent=43 // loop_header
                %s488 = sphi 0, %s490
                %p489 = scmp.ge.s32.totalorder %s488, %s481
                %s493 = sphi 0, %s500
                %s494 = sphi %s484, %s503
                %s495 = sphi %s486, %s504
              $region54: #{tpu_custom_call.1} parent=43 // loop_header_branch
                %492 = sbr.rel (%p489) target = $region58
              $region55: #{tpu_custom_call.1} parent=43 // loop_body
                %v496 = vld [vmem:[%s494] sm:%s449]
                %497 = vst [vmem:[%s495] sm:%s449] %v496
                %s498 = sadd.s32 1, %s493
                %p499 = scmp.ge.s32.totalorder %s498, %s481
                %s500 = scalar_select %p499, 0, %s498
                %s501 = smul.u32 %s500, 4
                %s502 = smul.u32 %s500, 4
                %s503 = scalar_lea.vmem %s484, %s501 [#allocation2]
                %s504 = scalar_lea.vmem %s486, %s502
              $region56: #{tpu_custom_call.1} parent=43 // loop_footer
                %s490 = sadd.s32 %s488, 1
              $region57: #{tpu_custom_call.1} parent=43 // loop_footer_branch
                %487 = sbr.rel target = $region53
              $region58: #{tpu_custom_call.1} parent=43 // loop_exit
                _
            $region44: #{tpu_custom_call.1} parent=35 // pred_fallthru
              _
          $region36: #{tpu_custom_call.1} parent=31 // pred_fallthru
            _
          %564 = vnop
        $region32: #{tpu_custom_call.1} parent=27 // pred_fallthru
          _
      $region28: #{tpu_custom_call.1} parent=5 // pred_fallthru
        _
      %p565 = scmp.le.s32.totalorder 2, %s8
      // Predicated region
      $region77: #{tpu_custom_call.1} parent=5 // pred_check
        %p566 = pneg %p565
      $region78: #{tpu_custom_call.1} parent=5 // pred_check_branch
        %568 = sbr.rel (%p566) target = $region80
      $region79: #{tpu_custom_call.1} parent=5 // pred_region
        %s569 = ssub.s32 %s8, 2
        // Predicated region
        $region81: #{tpu_custom_call.1} parent=79 // pred_check
          %p570 = pneg %p84
        $region82: #{tpu_custom_call.1} parent=79 // pred_check_branch
          %572 = sbr.rel (%p570) target = $region84
        $region83: #{tpu_custom_call.1} parent=79 // pred_region
          %s573 = sand.u32 %s69, 1
          %s574 = sand.u32 %s69, 1
          %s575 = smul.addr %s574, 24
          %s576 = scalar_lea.vmem [#allocation2], %s575
        $region84: #{tpu_custom_call.1} parent=79 // pred_fallthru
          _
      $region80: #{tpu_custom_call.1} parent=5 // pred_fallthru
        _
    $region6: #{tpu_custom_call.1} parent=1 // loop_footer
      %s12 = sadd.s32 1, %s8
    $region7: #{tpu_custom_call.1} parent=1 // loop_footer_branch
      %7 = sbr.rel target = $region3
    $region8: #{tpu_custom_call.1} parent=1 // loop_exit
      _

</llo_original>
